<compile_context>
chip_gen: v5e
topology: v5e:2x2
jax: 0.10.0
libtpu: 0.0.40
codegen_flags: <defaults>
</compile_context>

<pallas_src>
import functools

import jax
import jax.numpy as jnp
from jax import lax
from jax.experimental import pallas as pl
from jax.experimental.pallas import tpu as pltpu

_EPS = 1e-12  # torch.nn.functional.normalize default eps


def _cdiv(a, b):
    return -(-a // b)


def _tpu_config():
    """Returns (vmem_capacity_bytes, num_tensorcores) with safe fallbacks."""
    vmem_cap = 128 * 1024 * 1024
    num_cores = 1
    try:
        info = pltpu.get_tpu_info()
        vmem_cap = int(getattr(info, "vmem_capacity_bytes", vmem_cap))
        # v7x exposes 64 MiB VMEM per TensorCore and has 2 TCs/chip;
        # v5e/v6e have 128 MiB and a single TensorCore.
        num_cores = 2 if vmem_cap <= 64 * 1024 * 1024 else 1
    except Exception:  # conservative defaults if the query is unavailable
        vmem_cap = 64 * 1024 * 1024
        num_cores = 1
    return vmem_cap, num_cores


def _rsqrt_refined(x):
    # EUP rsqrt + one Newton step for near-f32 parity with torch's divide.
    y = lax.rsqrt(x)
    return y * (1.5 - 0.5 * x * y * y)


def _euclid_dist_loss_kernel(x1_ref, x2_ref, out_ref, *,
                             batch_size, batch_tile, tiles_per_core):
    """Per core: accumulate sum_b ||normalize(x1_b) - normalize(x2_b)||^2."""
    c = pl.program_id(0)   # TensorCore split (parallel)
    i = pl.program_id(1)   # batch tiles within a core (arbitrary / serial)

    @pl.when(i == 0)
    def _init():
        out_ref[...] = jnp.zeros_like(out_ref)

    x1 = x1_ref[...].astype(jnp.float32)            # (TB, D)
    x2 = x2_ref[...].astype(jnp.float32)            # (TB, D)

    # Row-wise reductions along the feature axis (PyTorch dim=1 -> lane axis).
    s1 = jnp.sum(x1 * x1, axis=1, keepdims=True)    # (TB, 1)
    s2 = jnp.sum(x2 * x2, axis=1, keepdims=True)    # (TB, 1)
    dt = jnp.sum(x1 * x2, axis=1, keepdims=True)    # (TB, 1)

    # inv = 1 / max(||x||, eps) == rsqrt(max(sumsq, eps^2))  (sqrt monotone)
    inv1 = _rsqrt_refined(jnp.maximum(s1, _EPS * _EPS))
    inv2 = _rsqrt_refined(jnp.maximum(s2, _EPS * _EPS))

    # ||n1 - n2||^2, expanded; clamp against cancellation rounding below 0.
    dist2 = s1 * inv1 * inv1 + s2 * inv2 * inv2 - 2.0 * dt * inv1 * inv2
    dist2 = jnp.maximum(dist2, 0.0)

    # Mask rows outside the real batch (ragged tail tile and clamped tiles).
    # Use a select (not multiply) so garbage/NaN in padded rows cannot leak.
    row0 = (c * tiles_per_core + i) * batch_tile
    rows = row0 + lax.broadcasted_iota(jnp.int32, (batch_tile, 1), 0)
    dist2 = jnp.where(rows < batch_size, dist2, 0.0)

    # Scalar splat-add into the resident lane-dense (1, 8, 128) output block.
    out_ref[...] += jnp.sum(dist2)


def euclidean_dist_loss(latent1, latent2, *, max_batch_tile=4096):
    """Pallas implementation of EuclideanDistLoss.forward. Returns scalar f32."""
    assert latent1.shape == latent2.shape, "latent shapes must match"
    assert latent1.ndim == 2, "expected (B, D) latents"
    B, D = latent1.shape
    assert B >= 1 and D >= 1
    itemsize = jnp.dtype(latent1.dtype).itemsize

    vmem_cap, num_cores = _tpu_config()

    # ~VMEM/16 per input block: 8 MiB on 128 MiB chips, 4 MiB on v7x's 64 MiB.
    target_block_bytes = vmem_cap // 16

    per_core = _cdiv(B, num_cores)
    per_core8 = _cdiv(per_core, 8) * 8

    bt = target_block_bytes // max(D * itemsize, 1)
    bt = max(8, min((int(bt) // 8) * 8, max_batch_tile, per_core8))
    batch_tile = B if B < 8 else bt           # tiny batches: block == full dim

    tiles_per_core = _cdiv(per_core, batch_tile)
    n_valid_blocks = _cdiv(B, batch_tile)     # blocks whose start is in-bounds
    grid = (num_cores, tiles_per_core)

    def in_map(c, i):
        # Clamp fully out-of-range tiles (possible for the 2-core split) onto
        # the last valid block; their rows are masked to zero in the kernel.
        idx = jnp.minimum(c * tiles_per_core + i, n_valid_blocks - 1)
        return (idx, 0)

    # VMEM budget from actual usage: 2 inputs x 2 pipeline buffers in the
    # input dtype + f32 upcast temporaries, plus margin for the tiny output.
    block_bytes = batch_tile * D * itemsize
    f32_block = batch_tile * D * 4
    vmem_limit = 2 * 2 * block_bytes + 4 * f32_block + (2 << 20)
    vmem_limit = int(max(32 << 20, min(vmem_limit, (vmem_cap * 3) // 4)))

    kernel = functools.partial(
        _euclid_dist_loss_kernel,
        batch_size=B, batch_tile=batch_tile, tiles_per_core=tiles_per_core)

    partials = pl.pallas_call(
        kernel,
        out_shape=jax.ShapeDtypeStruct((num_cores, 8, 128), jnp.float32),
        grid_spec=pltpu.PrefetchScalarGridSpec(
            num_scalar_prefetch=0,
            grid=grid,
            in_specs=[
                pl.BlockSpec((batch_tile, D), in_map),
                pl.BlockSpec((batch_tile, D), in_map),
            ],
            out_specs=pl.BlockSpec((1, 8, 128), lambda c, i: (c, 0, 0)),
        ),
        compiler_params=pltpu.CompilerParams(
            dimension_semantics=("parallel", "arbitrary"),
            vmem_limit_bytes=vmem_limit,
        ),
    )(latent1, latent2)

    # Every element of a core's (8,128) block holds that core's partial sum.
    return jnp.sum(partials[:, 0, 0]) / jnp.float32(B)


def _reference(latent1, latent2):
    x1 = latent1.astype(jnp.float32)
    x2 = latent2.astype(jnp.float32)
    n1 = x1 / jnp.maximum(jnp.linalg.norm(x1, axis=1, keepdims=True), _EPS)
    n2 = x2 / jnp.maximum(jnp.linalg.norm(x2, axis=1, keepdims=True), _EPS)
    d = jnp.linalg.norm(n1 - n2, axis=1)
    return jnp.mean(d ** 2)


if __name__ == "__main__":
    key = jax.random.PRNGKey(0)

    # Small shapes consistent with the module's (B, D) latents.
    # (8, 32): aligned;  (52, 96): ragged tail (in-kernel mask);  (5, 40): B < 8.
    for (B, D) in [(8, 32), (52, 96), (5, 40)]:
        key, k1, k2 = jax.random.split(key, 3)
        latent1 = jax.random.normal(k1, (B, D), dtype=jnp.float32)
        latent2 = jax.random.normal(k2, (B, D), dtype=jnp.float32)

        loss = jax.block_until_ready(euclidean_dist_loss(latent1, latent2))
        ref = _reference(latent1, latent2)
        assert jnp.allclose(loss, ref, rtol=1e-5, atol=1e-5), (B, D, loss, ref)

    print("KERNEL_OK")
</pallas_src>

<mosaic_0001>
module attributes {stable_mosaic.version = 11 : i64} {
  func.func @_euclid_dist_loss_kernel(%arg0: i32, %arg1: i32, %arg2: memref<8x32xf32, #tpu.memory_space<vmem>>, %arg3: memref<8x32xf32, #tpu.memory_space<vmem>>, %arg4: memref<1x8x128xf32, #tpu.memory_space<vmem>>) attributes {dimension_semantics = [#tpu.dimension_semantics<parallel>, #tpu.dimension_semantics<arbitrary>], iteration_bounds = array<i64: 1, 1>, scalar_prefetch = 0 : i64, scratch_operands = 0 : i64, tpu.core_type = #tpu.core_type<tc>, window_params = [{transform_indices = @transform_0, window_bounds = array<i64: 8, 32>}, {transform_indices = @transform_1, window_bounds = array<i64: 8, 32>}, {transform_indices = @transform_2, window_bounds = array<i64: 1, 8, 128>}]} {
    %c0_i32 = arith.constant 0 : i32
    %0 = arith.cmpi eq, %arg1, %c0_i32 : i32
    %1 = arith.extui %0 : i1 to i32
    %c0_i32_0 = arith.constant 0 : i32
    %2 = arith.cmpi ne, %1, %c0_i32_0 : i32
    scf.if %2 {
      %cst_23 = arith.constant 0.000000e+00 : f32
      %64 = vector.broadcast %cst_23 : f32 to vector<1x8x128xf32>
      %c0_24 = arith.constant 0 : index
      %c0_25 = arith.constant 0 : index
      %c0_26 = arith.constant 0 : index
      %65 = vector.load %arg4[%c0_24, %c0_25, %c0_26] : memref<1x8x128xf32, #tpu.memory_space<vmem>>, vector<1x8x128xf32>
      tpu.vector_store %arg4[%c0_24, %c0_25, %c0_26], %64 {strides = array<i32>} : memref<1x8x128xf32, #tpu.memory_space<vmem>>, vector<1x8x128xf32>,
    } else {
    }
    %c0 = arith.constant 0 : index
    %c0_1 = arith.constant 0 : index
    %3 = vector.load %arg2[%c0, %c0_1] : memref<8x32xf32, #tpu.memory_space<vmem>>, vector<8x32xf32>
    %c0_2 = arith.constant 0 : index
    %c0_3 = arith.constant 0 : index
    %4 = vector.load %arg3[%c0_2, %c0_3] : memref<8x32xf32, #tpu.memory_space<vmem>>, vector<8x32xf32>
    %5 = arith.mulf %3, %3 : vector<8x32xf32>
    %cst = arith.constant dense<0.000000e+00> : vector<8xf32>
    %6 = vector.multi_reduction <add>, %5, %cst [1] : vector<8x32xf32> to vector<8xf32>
    %7 = vector.shape_cast %6 : vector<8xf32> to vector<8x1xf32>
    %8 = arith.mulf %4, %4 : vector<8x32xf32>
    %cst_4 = arith.constant dense<0.000000e+00> : vector<8xf32>
    %9 = vector.multi_reduction <add>, %8, %cst_4 [1] : vector<8x32xf32> to vector<8xf32>
    %10 = vector.shape_cast %9 : vector<8xf32> to vector<8x1xf32>
    %11 = arith.mulf %3, %4 : vector<8x32xf32>
    %cst_5 = arith.constant dense<0.000000e+00> : vector<8xf32>
    %12 = vector.multi_reduction <add>, %11, %cst_5 [1] : vector<8x32xf32> to vector<8xf32>
    %13 = vector.shape_cast %12 : vector<8xf32> to vector<8x1xf32>
    %cst_6 = arith.constant 1.000000e-24 : f32
    %14 = vector.broadcast %cst_6 : f32 to vector<8x1xf32>
    %15 = arith.maximumf %7, %14 : vector<8x1xf32>
    %16 = math.rsqrt %15 : vector<8x1xf32>
    %cst_7 = arith.constant 5.000000e-01 : f32
    %17 = vector.broadcast %cst_7 : f32 to vector<8x1xf32>
    %18 = arith.mulf %17, %15 : vector<8x1xf32>
    %19 = arith.mulf %18, %16 : vector<8x1xf32>
    %20 = arith.mulf %19, %16 : vector<8x1xf32>
    %cst_8 = arith.constant 1.500000e+00 : f32
    %21 = vector.broadcast %cst_8 : f32 to vector<8x1xf32>
    %22 = arith.subf %21, %20 : vector<8x1xf32>
    %23 = arith.mulf %16, %22 : vector<8x1xf32>
    %cst_9 = arith.constant 1.000000e-24 : f32
    %24 = vector.broadcast %cst_9 : f32 to vector<8x1xf32>
    %25 = arith.maximumf %10, %24 : vector<8x1xf32>
    %26 = math.rsqrt %25 : vector<8x1xf32>
    %cst_10 = arith.constant 5.000000e-01 : f32
    %27 = vector.broadcast %cst_10 : f32 to vector<8x1xf32>
    %28 = arith.mulf %27, %25 : vector<8x1xf32>
    %29 = arith.mulf %28, %26 : vector<8x1xf32>
    %30 = arith.mulf %29, %26 : vector<8x1xf32>
    %cst_11 = arith.constant 1.500000e+00 : f32
    %31 = vector.broadcast %cst_11 : f32 to vector<8x1xf32>
    %32 = arith.subf %31, %30 : vector<8x1xf32>
    %33 = arith.mulf %26, %32 : vector<8x1xf32>
    %34 = arith.mulf %7, %23 : vector<8x1xf32>
    %35 = arith.mulf %34, %23 : vector<8x1xf32>
    %36 = arith.mulf %10, %33 : vector<8x1xf32>
    %37 = arith.mulf %36, %33 : vector<8x1xf32>
    %38 = arith.addf %35, %37 : vector<8x1xf32>
    %cst_12 = arith.constant 2.000000e+00 : f32
    %39 = vector.broadcast %cst_12 : f32 to vector<8x1xf32>
    %40 = arith.mulf %39, %13 : vector<8x1xf32>
    %41 = arith.mulf %40, %23 : vector<8x1xf32>
    %42 = arith.mulf %41, %33 : vector<8x1xf32>
    %43 = arith.subf %38, %42 : vector<8x1xf32>
    %cst_13 = arith.constant 0.000000e+00 : f32
    %44 = vector.broadcast %cst_13 : f32 to vector<8x1xf32>
    %45 = arith.maximumf %43, %44 : vector<8x1xf32>
    %c1_i32 = arith.constant 1 : i32
    %46 = arith.muli %arg0, %c1_i32 : i32
    %47 = arith.addi %46, %arg1 : i32
    %c8_i32 = arith.constant 8 : i32
    %48 = arith.muli %47, %c8_i32 : i32
    %49 = tpu.iota {dimensions = array<i32: 0>} : vector<8x1xi32>
    %50 = vector.broadcast %48 : i32 to vector<8x1xi32>
    %51 = arith.addi %50, %49 : vector<8x1xi32>
    %c8_i32_14 = arith.constant 8 : i32
    %52 = vector.broadcast %c8_i32_14 : i32 to vector<8x1xi32>
    %53 = arith.cmpi slt, %51, %52 : vector<8x1xi32>
    %cst_15 = arith.constant 0.000000e+00 : f32
    %54 = vector.broadcast %cst_15 : f32 to vector<8x1xf32>
    %55 = arith.select %53, %45, %54 : vector<8x1xi1>, vector<8x1xf32>
    %c0_16 = arith.constant 0 : index
    %c0_17 = arith.constant 0 : index
    %c0_18 = arith.constant 0 : index
    %56 = vector.load %arg4[%c0_16, %c0_17, %c0_18] : memref<1x8x128xf32, #tpu.memory_space<vmem>>, vector<1x8x128xf32>
    %57 = vector.shape_cast %55 : vector<8x1xf32> to vector<1x8x1xf32>
    %cst_19 = arith.constant dense<0.000000e+00> : vector<1xf32>
    %58 = vector.multi_reduction <add>, %57, %cst_19 [1, 2] : vector<1x8x1xf32> to vector<1xf32>
    %59 = vector.shape_cast %58 : vector<1xf32> to vector<1x1x1xf32>
    %60 = vector.extract %59[0, 0, 0] : f32 from vector<1x1x1xf32>
    %61 = vector.broadcast %60 : f32 to vector<1x8x128xf32>
    %62 = arith.addf %56, %61 : vector<1x8x128xf32>
    %c0_20 = arith.constant 0 : index
    %c0_21 = arith.constant 0 : index
    %c0_22 = arith.constant 0 : index
    %63 = vector.load %arg4[%c0_20, %c0_21, %c0_22] : memref<1x8x128xf32, #tpu.memory_space<vmem>>, vector<1x8x128xf32>
    tpu.vector_store %arg4[%c0_20, %c0_21, %c0_22], %62 {strides = array<i32>} : memref<1x8x128xf32, #tpu.memory_space<vmem>>, vector<1x8x128xf32>,
    return
  }
  func.func @transform_0(%arg0: i32, %arg1: i32) -> (i32, i32) {
    %c1_i32 = arith.constant 1 : i32
    %0 = arith.muli %arg0, %c1_i32 : i32
    %1 = arith.addi %0, %arg1 : i32
    %c0_i32 = arith.constant 0 : i32
    %2 = arith.minsi %1, %c0_i32 : i32
    %c0_i32_0 = arith.constant 0 : i32
    %c0_i32_1 = arith.constant 0 : i32
    return %2, %c0_i32_0 : i32, i32
  }
  func.func @transform_1(%arg0: i32, %arg1: i32) -> (i32, i32) {
    %c1_i32 = arith.constant 1 : i32
    %0 = arith.muli %arg0, %c1_i32 : i32
    %1 = arith.addi %0, %arg1 : i32
    %c0_i32 = arith.constant 0 : i32
    %2 = arith.minsi %1, %c0_i32 : i32
    %c0_i32_0 = arith.constant 0 : i32
    %c0_i32_1 = arith.constant 0 : i32
    return %2, %c0_i32_0 : i32, i32
  }
  func.func @transform_2(%arg0: i32, %arg1: i32) -> (i32, i32, i32) {
    %c0_i32 = arith.constant 0 : i32
    %c0_i32_0 = arith.constant 0 : i32
    %c0_i32_1 = arith.constant 0 : i32
    return %arg0, %c0_i32, %c0_i32_0 : i32, i32, i32
  }
}

</mosaic_0001>

<llo_original>
// kernel: tpu_custom_call.1
$region0: #{tpu_custom_call.1}
  #allocation0 [shape = 'u32[]', space=smem, size = 0x4, offset = 0x4, fixed_abs, tag = 'smem constant byte address 0x4 - core index']
  #allocation1 [shape = 'u32[72,128]{1,0:T(1,128)}', space=vmem, size = 0x9000, scoped, tag = 'internal scratch']
  %s0 = inlined_call_operand.hbm [shape: f32[8,32], index: 0, kind: input, shape index: {}]
  %s1 = inlined_call_operand.hbm [shape: f32[8,32], index: 1, kind: input, shape index: {}]
  %s2 = inlined_call_operand.hbm [shape: f32[1,8,128], index: 2, kind: output, shape index: {}]
  %s3 = sld [smem:[#allocation0]]
  $region30: #{tpu_custom_call.1} parent=0
    _
  %s5 = ssub.s32 1, %s3
  %s6 = scalar_select 0, %s5, %s3
  $region1: #{tpu_custom_call.1} parent=0
    #allocation2 [shape = 'u8[4096]{0}', space=vmem, size = 0x1000, scoped, tag = 'input window, operand 0, single buffered']
    #allocation3 [shape = 's32[1]{0}', space=sflag, size = 0x4, scoped, tag = 'scoped memory for tpu_custom_call.1']
    #allocation4 [shape = 's32[1]{0}', space=sflag, size = 0x4, scoped, tag = 'scoped memory for tpu_custom_call.1']
    #allocation5 [shape = 'u8[4096]{0}', space=vmem, size = 0x1000, scoped, tag = 'input window, operand 1, single buffered']
    #allocation6 [shape = 's32[1]{0}', space=sflag, size = 0x4, scoped, tag = 'scoped memory for tpu_custom_call.1']
    #allocation7 [shape = 'u8[4096]{0}', space=vmem, size = 0x1000, scoped, tag = 'output window, operand 0, single buffered']
    %7 = vsyncpa [#allocation3], 0
    %8 = vsyncpa [#allocation6], 0
    %9 = vsyncpa [#allocation4], 0
    // Predicated region
    $region2: #{tpu_custom_call.1} parent=1 // pred_check
      _
    $region3: #{tpu_custom_call.1} parent=1 // pred_check_branch
      %11 = sbr.rel (0) target = $region5
    $region4: #{tpu_custom_call.1} parent=1 // pred_region
      %s12 = sadd.s32 0, 0
      %p13 = scmp.lt.s32.totalorder %s12, 0
      %s14 = scalar_select %p13, %s12, 0
      %16 = vsyncadd [#allocation3], 0
      %s17 = smul.addr %s14, 8
      %s18 = scalar_lea.hbm %s0, %s17
      %s20 = sshll.u32 %s18, 4
      %s21 = int_to_ptr.hbm [resolvable:$true] %s20
      %s22 = sshll.u32 [#allocation2], 4
      %s23 = int_to_ptr.vmem [resolvable:$true] %s22
      %25 = dma.hbm_to_vmem [thread:$0]  %s21, 128, %s23, [#allocation3]
    $region5: #{tpu_custom_call.1} parent=1 // pred_fallthru
      _
    // Predicated region
    $region6: #{tpu_custom_call.1} parent=1 // pred_check
      _
    $region7: #{tpu_custom_call.1} parent=1 // pred_check_branch
      %27 = sbr.rel (0) target = $region9
    $region8: #{tpu_custom_call.1} parent=1 // pred_region
      %s28 = sadd.s32 0, 0
      %p29 = scmp.lt.s32.totalorder %s28, 0
      %s30 = scalar_select %p29, %s28, 0
      %32 = vsyncadd [#allocation6], 0
      %s33 = smul.addr %s30, 8
      %s34 = scalar_lea.hbm %s1, %s33
      %s36 = sshll.u32 %s34, 4
      %s37 = int_to_ptr.hbm [resolvable:$true] %s36
      %s38 = sshll.u32 [#allocation5], 4
      %s39 = int_to_ptr.vmem [resolvable:$true] %s38
      %41 = dma.hbm_to_vmem [thread:$0]  %s37, 128, %s39, [#allocation6]
    $region9: #{tpu_custom_call.1} parent=1 // pred_fallthru
      _
    // Predicated region
    $region10: #{tpu_custom_call.1} parent=1 // pred_check
      _
    $region11: #{tpu_custom_call.1} parent=1 // pred_check_branch
      %43 = sbr.rel (0) target = $region13
    $region12: #{tpu_custom_call.1} parent=1 // pred_region
      %45 = dma.done [#allocation3], 128
    $region13: #{tpu_custom_call.1} parent=1 // pred_fallthru
      _
    // Predicated region
    $region14: #{tpu_custom_call.1} parent=1 // pred_check
      _
    $region15: #{tpu_custom_call.1} parent=1 // pred_check_branch
      %47 = sbr.rel (0) target = $region17
    $region16: #{tpu_custom_call.1} parent=1 // pred_region
      %49 = dma.done [#allocation6], 128
    $region17: #{tpu_custom_call.1} parent=1 // pred_fallthru
      _
    %s50 = sadd.s32 0, 0
    %p51 = scmp.lt.s32.totalorder %s50, 0
    %s52 = scalar_select %p51, %s50, 0
    %s53 = sadd.s32 0, 0
    %p54 = scmp.lt.s32.totalorder %s53, 0
    %s55 = scalar_select %p54, %s53, 0
    %p56 = scmp.eq.s32.totalorder 0, 0
    // Predicated region
    $region18: #{tpu_custom_call.1} parent=1 // pred_check
      %p57 = pneg %p56
    $region19: #{tpu_custom_call.1} parent=1 // pred_check_branch
      %59 = sbr.rel (%p57) target = $region21
    $region20: #{tpu_custom_call.1} parent=1 // pred_region
      %60 = vst [vmem:[#allocation7] sm:$0xff] 0.0
    $region21: #{tpu_custom_call.1} parent=1 // pred_fallthru
      _
    %v61 = vld [vmem:[#allocation2] sm:$0xff]
    %v62 = vld [vmem:[#allocation5] sm:$0xff]
    %v63 = vmul.f32 %v61, %v61
    %vm64 = vcmask 261120
    %v65 = vsel %vm64, %v63, 0.0
    %66 = vadd.xlane.f32.xlu0 %v65
    %v67 = vpop.xlane.xlu0 %66
    %v68 = vmul.f32 %v62, %v62
    %v69 = vsel %vm64, %v68, 0.0
    %70 = vadd.xlane.f32.xlu0 %v69
    %v71 = vpop.xlane.xlu0 %70
    %v72 = vmul.f32 %v61, %v62
    %v73 = vsel %vm64, %v72, 0.0
    %74 = vadd.xlane.f32.xlu0 %v73
    %v75 = vpop.xlane.xlu0 %74
    %v76 = vmax.f32 %v67, 1e-24
    %v77 = vrsqrt.pop %v76
    %v78 = vmul.f32 %v77, %v76
    %v79 = vmul.f32 %v78, %v77
    %v80 = vmul.f32 0.5, %v79
    %v81 = vsub.f32 1.5, %v80
    %v82 = vmul.f32 %v77, %v81
    %vm83 = vweird.f32 %v76
    %vm84 = vweird.f32 %v77
    %vm85 = vmor %vm83, %vm84
    %v86 = vsel %vm85, %v77, %v82
    %v87 = vmul.f32 %v76, 0.5
    %v88 = vmul.f32 %v87, %v86
    %v89 = vmul.f32 %v88, %v86
    %v90 = vsub.f32 1.5, %v89
    %v91 = vmul.f32 %v86, %v90
    %v92 = vmax.f32 %v71, 1e-24
    %v93 = vrsqrt.pop %v92
    %v94 = vmul.f32 %v93, %v92
    %v95 = vmul.f32 %v94, %v93
    %v96 = vmul.f32 0.5, %v95
    %v97 = vsub.f32 1.5, %v96
    %v98 = vmul.f32 %v93, %v97
    %vm99 = vweird.f32 %v92
    %vm100 = vweird.f32 %v93
    %vm101 = vmor %vm99, %vm100
    %v102 = vsel %vm101, %v93, %v98
    %v103 = vmul.f32 %v92, 0.5
    %v104 = vmul.f32 %v103, %v102
    %v105 = vmul.f32 %v104, %v102
    %v106 = vsub.f32 1.5, %v105
    %v107 = vmul.f32 %v102, %v106
    %v108 = vmul.f32 %v67, %v91
    %v109 = vmul.f32 %v108, %v91
    %v110 = vmul.f32 %v71, %v107
    %v111 = vmul.f32 %v110, %v107
    %v112 = vadd.f32 %v109, %v111
    %v113 = vmul.f32 %v75, 2.0
    %v114 = vmul.f32 %v113, %v91
    %v115 = vmul.f32 %v114, %v107
    %v116 = vsub.f32 %v112, %v115
    %v117 = vmax.f32 %v116, 0.0
    %s118 = sadd.s32 0, 0
    %s119 = smul.u32 %s118, 8
    %v120 = vlaneseq
    %v121 = vshrl.u32 %v120, 7
    %v122 = vstv %s119
    %v123 = vadd.s32 %v122, %v121
    %vm124 = vcmp.lt.s32.totalorder %v123, 8
    %v125 = vsel %vm124, %v117, 0.0
    %v126 = vld [vmem:[#allocation7] sm:$0xff]
    %vm127 = vcmask 7168
    %v128 = vsel %vm127, %v125, 0.0
    %129 = vadd.xlane.f32.xlu0 %v128
    %v130 = vpop.xlane.xlu0 %129
    %v131 = vrot.slane %v130, 4
    %v132 = vadd.f32 %v130, %v131
    %v133 = vrot.slane %v132, 2
    %v134 = vadd.f32 %v132, %v133
    %v135 = vrot.slane %v134, 1
    %v136 = vadd.f32 %v134, %v135
    %s137 = vtos %v136
    %v138 = vstv %s137
    %v139 = vadd.f32 %v126, %v138
    %140 = vst [vmem:[#allocation7] sm:$0xff] %v139
    // Predicated region
    $region22: #{tpu_custom_call.1} parent=1 // pred_check
      _
    $region23: #{tpu_custom_call.1} parent=1 // pred_check_branch
      %142 = sbr.rel (0) target = $region25
    $region24: #{tpu_custom_call.1} parent=1 // pred_region
      %144 = vsyncadd [#allocation4], 0
      %s146 = sshll.u32 [#allocation7], 4
      %s147 = int_to_ptr.vmem [resolvable:$true] %s146
      %s148 = sshll.u32 %s2, 4
      %s149 = int_to_ptr.hbm [resolvable:$true] %s148
      %151 = dma.vmem_to_hbm [thread:$0]  %s147, 128, %s149, [#allocation4]
    $region25: #{tpu_custom_call.1} parent=1 // pred_fallthru
      _
    // Predicated region
    $region26: #{tpu_custom_call.1} parent=1 // pred_check
      _
    $region27: #{tpu_custom_call.1} parent=1 // pred_check_branch
      %153 = sbr.rel (0) target = $region29
    $region28: #{tpu_custom_call.1} parent=1 // pred_region
      %155 = dma.done [#allocation4], 128
    $region29: #{tpu_custom_call.1} parent=1 // pred_fallthru
      _
    %156 = vsyncpa [#allocation3], 1
    %157 = vsyncpa [#allocation6], 1
    %158 = vsyncpa [#allocation4], 1

</llo_original>
